<compile_context>
chip_gen: v7x
topology: tpu7x:2x2x1
jax: 0.10.0
libtpu: 0.0.40
codegen_flags: <defaults>
</compile_context>

<pallas_src>
import jax
import jax.numpy as jnp
from jax.experimental import pallas as pl
from jax.experimental.pallas import tpu as pltpu


LANE = 128        # vreg lane width (last dim of the 2D view)
ROW_TILE = 2048   # (2048, 128) f32 block = 1 MiB; mem-bound kernel is at the
                  # flat part of the tile-size/roofline curve here.


def _cosh_kernel(x_ref, o_ref):
    # Upcast inside the kernel so low-precision inputs don't double HBM traffic.
    x = x_ref[...].astype(jnp.float32)
    # Overflow-safe: exp(-|x|) never overflows; 1/exp(-|x|) = exp(|x|) overflows
    # exactly when cosh itself does (matches jnp.cosh semantics).
    e = jnp.exp(-jnp.abs(x))
    o_ref[...] = (0.5 * (e + pl.reciprocal(e, approx=False))).astype(o_ref.dtype)


def pallas_cosh(x: jax.Array) -> jax.Array:
    """Elementwise cosh via a Pallas TPU kernel. Works for any shape / float dtype."""
    orig_shape = x.shape
    orig_dtype = x.dtype

    flat = x.reshape(-1)
    n = flat.shape[0]
    if n == 0:
        return x  # nothing to do for empty tensors

    # Pad only up to a multiple of LANE (common NN shapes need no pad at all; the
    # padded tail is computed but sliced off below, which is harmless).
    n_pad = pl.cdiv(n, LANE) * LANE
    if n_pad != n:
        flat = jnp.pad(flat, (0, n_pad - n))
    rows = n_pad // LANE
    x2d = flat.reshape(rows, LANE)

    # Block rows: full extent for small inputs (block == array dim is always legal),
    # otherwise large ROW_TILE tiles; the ragged last block is masked by Pallas.
    row_tile = rows if rows < ROW_TILE else ROW_TILE
    grid = (pl.cdiv(rows, row_tile),)

    out2d = pl.pallas_call(
        _cosh_kernel,
        out_shape=jax.ShapeDtypeStruct((rows, LANE), orig_dtype),
        grid=grid,
        in_specs=[pl.BlockSpec((row_tile, LANE), lambda i: (i, 0))],
        out_specs=pl.BlockSpec((row_tile, LANE), lambda i: (i, 0)),
        compiler_params=pltpu.CompilerParams(
            # Each grid block is independent -> shard across the two TensorCores
            # on v7x (megacore); harmless on single-TC v5e/v6e.
            dimension_semantics=("parallel",),
        ),
    )(x2d)

    out = out2d.reshape(-1)[:n].reshape(orig_shape)
    return out


if __name__ == "__main__":
    key = jax.random.PRNGKey(0)
    # NCHW input, as produced by the torch module's typical usage.
    x = jax.random.normal(key, (2, 4, 16, 16), dtype=jnp.float32) * 2.0

    y = pallas_cosh(x)
    jax.block_until_ready(y)

    # sanity check against jnp reference
    y_ref = jnp.cosh(x)
    assert jnp.allclose(y, y_ref, atol=1e-5, rtol=1e-5), "mismatch vs jnp.cosh"

    print("KERNEL_OK")
</pallas_src>

<mosaic_0001>
module attributes {stable_mosaic.version = 11 : i64} {
  func.func @_cosh_kernel(%arg0: i32, %arg1: memref<16x128xf32, #tpu.memory_space<vmem>>, %arg2: memref<16x128xf32, #tpu.memory_space<vmem>>) attributes {dimension_semantics = [#tpu.dimension_semantics<parallel>], iteration_bounds = array<i64: 1>, scalar_prefetch = 0 : i64, scratch_operands = 0 : i64, tpu.core_type = #tpu.core_type<tc>, window_params = [{transform_indices = @transform_0, window_bounds = array<i64: 16, 128>}, {transform_indices = @transform_1, window_bounds = array<i64: 16, 128>}]} {
    %c0 = arith.constant 0 : index
    %c0_0 = arith.constant 0 : index
    %0 = vector.load %arg1[%c0, %c0_0] : memref<16x128xf32, #tpu.memory_space<vmem>>, vector<16x128xf32>
    %1 = math.absf %0 : vector<16x128xf32>
    %cst = arith.constant 0.000000e+00 : f32
    %2 = vector.broadcast %cst : f32 to vector<16x128xf32>
    %3 = arith.subf %2, %1 : vector<16x128xf32>
    %4 = math.exp %3 : vector<16x128xf32>
    %5 = tpu.reciprocal %4 : vector<16x128xf32> -> vector<16x128xf32>
    %6 = arith.addf %4, %5 : vector<16x128xf32>
    %cst_1 = arith.constant 5.000000e-01 : f32
    %7 = vector.broadcast %cst_1 : f32 to vector<16x128xf32>
    %8 = arith.mulf %7, %6 : vector<16x128xf32>
    %c0_2 = arith.constant 0 : index
    %c0_3 = arith.constant 0 : index
    %9 = vector.load %arg2[%c0_2, %c0_3] : memref<16x128xf32, #tpu.memory_space<vmem>>, vector<16x128xf32>
    tpu.vector_store %arg2[%c0_2, %c0_3], %8 {strides = array<i32>} : memref<16x128xf32, #tpu.memory_space<vmem>>, vector<16x128xf32>,
    return
  }
  func.func @transform_0(%arg0: i32) -> (i32, i32) {
    %c0_i32 = arith.constant 0 : i32
    %c0_i32_0 = arith.constant 0 : i32
    return %arg0, %c0_i32 : i32, i32
  }
  func.func @transform_1(%arg0: i32) -> (i32, i32) {
    %c0_i32 = arith.constant 0 : i32
    %c0_i32_0 = arith.constant 0 : i32
    return %arg0, %c0_i32 : i32, i32
  }
}

</mosaic_0001>

<llo_original>
// kernel: tpu_custom_call.1
$region0: #{tpu_custom_call.1}
  #allocation0 [shape = 'u32[]', space=smem, size = 0x4, offset = 0x4, fixed_abs, tag = 'smem constant byte address 0x4 - core index']
  #allocation1 [shape = 'u32[144,128]{1,0:T(1,128)}', space=vmem, size = 0x12000, scoped, tag = 'internal scratch']
  %s0 = inlined_call_operand.hbm [shape: f32[16,128], index: 0, kind: input, shape index: {}]
  %s1 = inlined_call_operand.hbm [shape: f32[16,128], index: 1, kind: output, shape index: {}]
  %s2 = sld [smem:[#allocation0]]
  $region18: #{tpu_custom_call.1} parent=0
    _
  %s4 = ssub.s32 1, %s2
  %s5 = scalar_select 0, %s4, %s2
  $region1: #{tpu_custom_call.1} parent=0
    #allocation2 [shape = 'u8[8192]{0}', space=vmem, size = 0x2000, scoped, tag = 'input window, operand 0, single buffered']
    #allocation3 [shape = 's32[1]{0}', space=sflag, size = 0x4, scoped, tag = 'scoped memory for tpu_custom_call.1']
    #allocation4 [shape = 's32[1]{0}', space=sflag, size = 0x4, scoped, tag = 'scoped memory for tpu_custom_call.1']
    #allocation5 [shape = 'u8[8192]{0}', space=vmem, size = 0x2000, scoped, tag = 'output window, operand 0, single buffered']
    %6 = vsyncpa [#allocation3], 0
    %7 = vsyncpa [#allocation4], 0
    // Predicated region
    $region2: #{tpu_custom_call.1} parent=1 // pred_check
      _
    $region3: #{tpu_custom_call.1} parent=1 // pred_check_branch
      %9 = sbr.rel (0) target = $region5
    $region4: #{tpu_custom_call.1} parent=1 // pred_region
      %s11 = ssub.s32 256, 256
      %12 = vsyncadd [#allocation3], %s11
      %s13 = sshll.u32 [#allocation2], 4
      %s14 = int_to_ptr.vmem [resolvable:$true] %s13
      %19 = dma.hbm_to_vmem [thread:$0]  %s0, 256, %s14, [#allocation3], 128, 128, 8
    $region5: #{tpu_custom_call.1} parent=1 // pred_fallthru
      _
    // Predicated region
    $region6: #{tpu_custom_call.1} parent=1 // pred_check
      _
    $region7: #{tpu_custom_call.1} parent=1 // pred_check_branch
      %21 = sbr.rel (0) target = $region9
    $region8: #{tpu_custom_call.1} parent=1 // pred_region
      %22 = dma.done [#allocation3], 256
    $region9: #{tpu_custom_call.1} parent=1 // pred_fallthru
      _
    %v23 = vld [vmem:[#allocation2] sm:$0xff]
    %v24 = vld [vmem:[#allocation2 + $0x8] sm:$0xff]
    %v25 = vand.u32 2147483647, %v23
    %v26 = vand.u32 2147483647, %v24
    %v27 = vsub.f32 0.0, %v25
    %v28 = vsub.f32 0.0, %v26
    %v29 = vmul.f32 %v27, 1.442695
    %v30 = vpow.pop %v29
    %v31 = vmul.f32 %v28, 1.442695
    %v32 = vpow.pop %v31
    %v33 = vrcp.pop %v30
    %v34 = vrcp.pop %v32
    %v35 = vadd.f32 %v30, %v33
    %v36 = vadd.f32 %v32, %v34
    %v37 = vmul.f32 %v35, 0.5
    %v38 = vmul.f32 %v36, 0.5
    %39 = vst [vmem:[#allocation5] sm:$0xff] %v37
    %40 = vst [vmem:[#allocation5 + $0x8] sm:$0xff] %v38
    // Predicated region
    $region10: #{tpu_custom_call.1} parent=1 // pred_check
      _
    $region11: #{tpu_custom_call.1} parent=1 // pred_check_branch
      %42 = sbr.rel (0) target = $region13
    $region12: #{tpu_custom_call.1} parent=1 // pred_region
      %s44 = ssub.s32 256, 256
      %45 = vsyncadd [#allocation4], %s44
      %s46 = sshll.u32 [#allocation5], 4
      %s47 = int_to_ptr.vmem [resolvable:$true] %s46
      %52 = dma.vmem_to_hbm [thread:$0]  %s47, 256, %s1, [#allocation4], 128, 128, 8
    $region13: #{tpu_custom_call.1} parent=1 // pred_fallthru
      _
    // Predicated region
    $region14: #{tpu_custom_call.1} parent=1 // pred_check
      _
    $region15: #{tpu_custom_call.1} parent=1 // pred_check_branch
      %54 = sbr.rel (0) target = $region17
    $region16: #{tpu_custom_call.1} parent=1 // pred_region
      %55 = dma.done [#allocation4], 256
    $region17: #{tpu_custom_call.1} parent=1 // pred_fallthru
      _
    %56 = vsyncpa [#allocation3], 1
    %57 = vsyncpa [#allocation4], 1

</llo_original>
